<compile_context>
chip_gen: v6e
topology: v6e:2x2x1
jax: 0.10.0
libtpu: 0.0.40
codegen_flags: <defaults>
</compile_context>

<pallas_src>
import jax
import jax.numpy as jnp
from jax.experimental import pallas as pl
from jax.experimental.pallas import tpu as pltpu

EPS = 1e-5  # nn.InstanceNorm2d default eps


def _pick_spatial_tile(pn, max_tile=2048):
    """Largest multiple of 128 that divides pn and is <= max_tile, else pn."""
    best = None
    t = 128
    while t <= min(max_tile, pn):
        if pn % t == 0:
            best = t
        t += 128
    return best if best is not None else pn


def _im2col_reflect_t(x, K=4, S=2, P=1):
    """x: (N, C, H, W) -> patches^T (N, C*K*K, OH*OW); feature order (c, kh, kw)."""
    N, C, H, W = x.shape
    OH = (H + 2 * P - K) // S + 1
    OW = (W + 2 * P - K) // S + 1
    xp = jnp.pad(x, ((0, 0), (0, 0), (P, P), (P, P)), mode="reflect")
    cols = []
    for kh in range(K):
        for kw in range(K):
            cols.append(xp[:, :, kh:kh + S * OH:S, kw:kw + S * OW:S])  # (N,C,OH,OW)
    p = jnp.stack(cols, axis=2)                    # (N, C, K*K, OH, OW), idx = kh*K+kw
    return p.reshape(N, C * K * K, OH * OW), OH, OW


def block_forward(x, conv_w, gamma, beta):
    """x: (N, Cin, H, W) NCHW; conv_w: (Cout, Cin, 4, 4); gamma/beta: (Cout,).
    Returns (N, Cout, H//2, W//2) NCHW float32."""
    N, Cin, H, W = x.shape
    Cout = conv_w.shape[0]
    Kf = Cin * 16

    patches, OH, OW = _im2col_reflect_t(x)         # (N, Kf, Pn)
    Pn = OH * OW
    tile_p = _pick_spatial_tile(Pn)
    n_tiles = Pn // tile_p

    # bf16 MXU operands; norm params stay f32.
    patches = patches.astype(jnp.bfloat16)
    w2d = conv_w.reshape(Cout, Kf).astype(jnp.bfloat16)   # feature order (c, kh, kw)
    g2d = gamma.reshape(Cout, 1).astype(jnp.float32)
    b2d = beta.reshape(Cout, 1).astype(jnp.float32)

    inv_p = 1.0 / float(Pn)

    def kernel(w_ref, g_ref, b_ref, p_ref, o_ref, sum_ref, sq_ref):
        # w_ref : (Cout, Kf)      bf16   (shared)
        # g_ref : (Cout, 1)       f32
        # b_ref : (Cout, 1)       f32
        # p_ref : (Kf, tile_p)    bf16   (spatial tile of one batch element)
        # o_ref : (Cout, Pn)      f32    (resident across the spatial-tile axis)
        # sum_ref, sq_ref : (Cout, 1) f32 scratch
        t = pl.program_id(1)
        nt = pl.num_programs(1)

        @pl.when(t == 0)
        def _():
            sum_ref[...] = jnp.zeros(sum_ref.shape, sum_ref.dtype)
            sq_ref[...] = jnp.zeros(sq_ref.shape, sq_ref.dtype)

        # MXU: (Cout, Kf) @ (Kf, tile_p) -> (Cout, tile_p); lane axis = spatial.
        y = jnp.dot(w_ref[...], p_ref[...], preferred_element_type=jnp.float32)

        # One-pass instance-norm statistics (streamed over spatial tiles).
        sum_ref[...] += jnp.sum(y, axis=-1, keepdims=True)
        sq_ref[...] += jnp.sum(y * y, axis=-1, keepdims=True)

        if n_tiles == 1:
            o_ref[...] = y
        else:
            off = pl.multiple_of(t * tile_p, tile_p)       # tile_p % 128 == 0 here
            o_ref[:, pl.ds(off, tile_p)] = y

        @pl.when(t == nt - 1)
        def _():
            mean = sum_ref[...] * inv_p                              # (Cout, 1)
            var = jnp.maximum(sq_ref[...] * inv_p - mean * mean, 0.0)
            scale = g_ref[...] * jax.lax.rsqrt(var + EPS)
            shift = b_ref[...] - mean * scale
            o_ref[...] = jnp.maximum(o_ref[...] * scale + shift, 0.0)  # affine + ReLU

    # Rough VMEM need (double-buffered patch tile + weights + resident output);
    # only raise the scoped limit when it exceeds the 32 MiB default.
    need = (2 * Kf * tile_p * 2            # patch tile, bf16, double-buffered
            + Cout * Kf * 2                # weights, bf16
            + 2 * Cout * Pn * 4            # resident output block (+ writeback)
            + 8 * Cout * 4                 # gamma/beta/stats
            + (4 << 20))                   # headroom
    cp_kwargs = dict(dimension_semantics=("parallel", "arbitrary"))
    if need > (32 << 20):
        cp_kwargs["vmem_limit_bytes"] = int(need)

    cost = pl.CostEstimate(
        flops=2 * N * Pn * Kf * Cout,
        transcendentals=0,
        bytes_accessed=(patches.size * 2 + w2d.size * 2
                        + g2d.size * 4 + b2d.size * 4 + N * Cout * Pn * 4),
    )

    out = pl.pallas_call(
        kernel,
        out_shape=jax.ShapeDtypeStruct((N, Cout, Pn), jnp.float32),
        grid_spec=pltpu.PrefetchScalarGridSpec(
            num_scalar_prefetch=0,
            grid=(N, n_tiles),
            in_specs=[
                pl.BlockSpec((Cout, Kf), lambda n, t: (0, 0)),          # weight (shared)
                pl.BlockSpec((Cout, 1), lambda n, t: (0, 0)),           # gamma
                pl.BlockSpec((Cout, 1), lambda n, t: (0, 0)),           # beta
                pl.BlockSpec((None, Kf, tile_p), lambda n, t: (n, 0, t)),  # patches^T
            ],
            out_specs=pl.BlockSpec((None, Cout, Pn), lambda n, t: (n, 0, 0)),
            scratch_shapes=[pltpu.VMEM((Cout, 1), jnp.float32),
                            pltpu.VMEM((Cout, 1), jnp.float32)],
        ),
        compiler_params=pltpu.CompilerParams(**cp_kwargs),
        cost_estimate=cost,
    )(w2d, g2d, b2d, patches)

    # (N, Cout, OH*OW) is already NCHW-contiguous: free reshape, no transpose.
    return out.reshape(N, Cout, OH, OW)


def _reference(x, conv_w, gamma, beta):
    """Pure-JAX reference (matches PyTorch semantics)."""
    xp = jnp.pad(x, ((0, 0), (0, 0), (1, 1), (1, 1)), mode="reflect")
    y = jax.lax.conv_general_dilated(
        xp, conv_w, window_strides=(2, 2), padding="VALID",
        dimension_numbers=("NCHW", "OIHW", "NCHW"))
    mean = jnp.mean(y, axis=(2, 3), keepdims=True)
    var = jnp.mean((y - mean) ** 2, axis=(2, 3), keepdims=True)
    y = (y - mean) / jnp.sqrt(var + EPS)
    y = y * gamma.reshape(1, -1, 1, 1) + beta.reshape(1, -1, 1, 1)
    return jnp.maximum(y, 0.0)


if __name__ == "__main__":
    key = jax.random.PRNGKey(0)
    N, Cin, Cout, H, W = 2, 4, 8, 16, 16

    kx, kw = jax.random.split(key)
    x = jax.random.normal(kx, (N, Cin, H, W), dtype=jnp.float32)
    # Deterministic parameters (shapes from Conv2d / InstanceNorm2d(affine=True)).
    conv_w = 0.1 * jax.random.normal(kw, (Cout, Cin, 4, 4), dtype=jnp.float32)
    gamma = jnp.ones((Cout,), jnp.float32)   # InstanceNorm2d affine weight init
    beta = jnp.zeros((Cout,), jnp.float32)   # InstanceNorm2d affine bias init

    out = jax.block_until_ready(block_forward(x, conv_w, gamma, beta))
    assert out.shape == (N, Cout, H // 2, W // 2)

    # Reference on bf16-rounded operands (the kernel feeds the MXU bf16), so the
    # comparison isolates kernel correctness from bf16 input rounding.
    x_q = x.astype(jnp.bfloat16).astype(jnp.float32)
    w_q = conv_w.astype(jnp.bfloat16).astype(jnp.float32)
    ref = _reference(x_q, w_q, gamma, beta)
    if not jnp.allclose(out, ref, atol=1e-2, rtol=1e-2):
        raise AssertionError("Pallas kernel does not match reference")
    print("KERNEL_OK")
</pallas_src>

<mosaic_0001>
module attributes {stable_mosaic.version = 11 : i64} {
  func.func @kernel(%arg0: i32, %arg1: i32, %arg2: memref<8x64xbf16, #tpu.memory_space<vmem>>, %arg3: memref<8x1xf32, #tpu.memory_space<vmem>>, %arg4: memref<8x1xf32, #tpu.memory_space<vmem>>, %arg5: memref<1x64x64xbf16, #tpu.memory_space<vmem>>, %arg6: memref<1x8x64xf32, #tpu.memory_space<vmem>>, %arg7: memref<8x1xf32, #tpu.memory_space<vmem>>, %arg8: memref<8x1xf32, #tpu.memory_space<vmem>>) attributes {dimension_semantics = [#tpu.dimension_semantics<parallel>, #tpu.dimension_semantics<arbitrary>], iteration_bounds = array<i64: 2, 1>, scalar_prefetch = 0 : i64, scratch_operands = 2 : i64, tpu.core_type = #tpu.core_type<tc>, window_params = [{pipeline_mode = #tpu.pipeline_mode<synchronous>, transform_indices = @transform_0, window_bounds = array<i64: 8, 64>}, {pipeline_mode = #tpu.pipeline_mode<synchronous>, transform_indices = @transform_1, window_bounds = array<i64: 8, 1>}, {pipeline_mode = #tpu.pipeline_mode<synchronous>, transform_indices = @transform_2, window_bounds = array<i64: 8, 1>}, {transform_indices = @transform_3, window_bounds = array<i64: 1, 64, 64>}, {transform_indices = @transform_4, window_bounds = array<i64: 1, 8, 64>}]} {
    %c0_i32 = arith.constant 0 : i32
    %0 = arith.cmpi eq, %arg1, %c0_i32 : i32
    %1 = arith.extui %0 : i1 to i32
    %c0_i32_0 = arith.constant 0 : i32
    %2 = arith.cmpi ne, %1, %c0_i32_0 : i32
    scf.if %2 {
      %cst_20 = arith.constant 0.000000e+00 : f32
      %24 = vector.broadcast %cst_20 : f32 to vector<8x1xf32>
      %c0_21 = arith.constant 0 : index
      %c0_22 = arith.constant 0 : index
      %25 = vector.load %arg7[%c0_21, %c0_22] : memref<8x1xf32, #tpu.memory_space<vmem>>, vector<8x1xf32>
      tpu.vector_store %arg7[%c0_21, %c0_22], %24 {strides = array<i32>} : memref<8x1xf32, #tpu.memory_space<vmem>>, vector<8x1xf32>,
      %cst_23 = arith.constant 0.000000e+00 : f32
      %26 = vector.broadcast %cst_23 : f32 to vector<8x1xf32>
      %c0_24 = arith.constant 0 : index
      %c0_25 = arith.constant 0 : index
      %27 = vector.load %arg8[%c0_24, %c0_25] : memref<8x1xf32, #tpu.memory_space<vmem>>, vector<8x1xf32>
      tpu.vector_store %arg8[%c0_24, %c0_25], %26 {strides = array<i32>} : memref<8x1xf32, #tpu.memory_space<vmem>>, vector<8x1xf32>,
    } else {
    }
    %c0 = arith.constant 0 : index
    %c0_1 = arith.constant 0 : index
    %3 = vector.load %arg2[%c0, %c0_1] : memref<8x64xbf16, #tpu.memory_space<vmem>>, vector<8x64xbf16>
    %c0_2 = arith.constant 0 : index
    %c0_3 = arith.constant 0 : index
    %c0_4 = arith.constant 0 : index
    %4 = vector.load %arg5[%c0_2, %c0_3, %c0_4] : memref<1x64x64xbf16, #tpu.memory_space<vmem>>, vector<1x64x64xbf16>
    %5 = vector.shape_cast %4 : vector<1x64x64xbf16> to vector<64x64xbf16>
    %cst = arith.constant dense<0.000000e+00> : vector<8x64xf32>
    %6 = tpu.matmul %3, %5, %cst {dimension_numbers = #tpu.dot_dimension_numbers<[1], [0], [0], [1], [0, 0, 1, 1], [], []>} : vector<8x64xbf16>, vector<64x64xbf16>, vector<8x64xf32> -> vector<8x64xf32>
    %c0_5 = arith.constant 0 : index
    %c0_6 = arith.constant 0 : index
    %7 = vector.load %arg7[%c0_5, %c0_6] : memref<8x1xf32, #tpu.memory_space<vmem>>, vector<8x1xf32>
    %cst_7 = arith.constant dense<0.000000e+00> : vector<8xf32>
    %8 = vector.multi_reduction <add>, %6, %cst_7 [1] : vector<8x64xf32> to vector<8xf32>
    %9 = vector.shape_cast %8 : vector<8xf32> to vector<8x1xf32>
    %10 = arith.addf %7, %9 : vector<8x1xf32>
    %c0_8 = arith.constant 0 : index
    %c0_9 = arith.constant 0 : index
    %11 = vector.load %arg7[%c0_8, %c0_9] : memref<8x1xf32, #tpu.memory_space<vmem>>, vector<8x1xf32>
    tpu.vector_store %arg7[%c0_8, %c0_9], %10 {strides = array<i32>} : memref<8x1xf32, #tpu.memory_space<vmem>>, vector<8x1xf32>,
    %c0_10 = arith.constant 0 : index
    %c0_11 = arith.constant 0 : index
    %12 = vector.load %arg8[%c0_10, %c0_11] : memref<8x1xf32, #tpu.memory_space<vmem>>, vector<8x1xf32>
    %13 = arith.mulf %6, %6 : vector<8x64xf32>
    %cst_12 = arith.constant dense<0.000000e+00> : vector<8xf32>
    %14 = vector.multi_reduction <add>, %13, %cst_12 [1] : vector<8x64xf32> to vector<8xf32>
    %15 = vector.shape_cast %14 : vector<8xf32> to vector<8x1xf32>
    %16 = arith.addf %12, %15 : vector<8x1xf32>
    %c0_13 = arith.constant 0 : index
    %c0_14 = arith.constant 0 : index
    %17 = vector.load %arg8[%c0_13, %c0_14] : memref<8x1xf32, #tpu.memory_space<vmem>>, vector<8x1xf32>
    tpu.vector_store %arg8[%c0_13, %c0_14], %16 {strides = array<i32>} : memref<8x1xf32, #tpu.memory_space<vmem>>, vector<8x1xf32>,
    %c0_15 = arith.constant 0 : index
    %c0_16 = arith.constant 0 : index
    %c0_17 = arith.constant 0 : index
    %18 = vector.load %arg6[%c0_15, %c0_16, %c0_17] : memref<1x8x64xf32, #tpu.memory_space<vmem>>, vector<1x8x64xf32>
    %19 = vector.shape_cast %18 : vector<1x8x64xf32> to vector<8x64xf32>
    %20 = vector.shape_cast %6 : vector<8x64xf32> to vector<1x8x64xf32>
    tpu.vector_store %arg6[%c0_15, %c0_16, %c0_17], %20 {strides = array<i32>} : memref<1x8x64xf32, #tpu.memory_space<vmem>>, vector<1x8x64xf32>,
    %c0_i32_18 = arith.constant 0 : i32
    %21 = arith.cmpi eq, %arg1, %c0_i32_18 : i32
    %22 = arith.extui %21 : i1 to i32
    %c0_i32_19 = arith.constant 0 : i32
    %23 = arith.cmpi ne, %22, %c0_i32_19 : i32
    scf.if %23 {
      %c0_20 = arith.constant 0 : index
      %c0_21 = arith.constant 0 : index
      %24 = vector.load %arg7[%c0_20, %c0_21] : memref<8x1xf32, #tpu.memory_space<vmem>>, vector<8x1xf32>
      %cst_22 = arith.constant 1.562500e-02 : f32
      %25 = vector.broadcast %cst_22 : f32 to vector<8x1xf32>
      %26 = arith.mulf %24, %25 : vector<8x1xf32>
      %c0_23 = arith.constant 0 : index
      %c0_24 = arith.constant 0 : index
      %27 = vector.load %arg8[%c0_23, %c0_24] : memref<8x1xf32, #tpu.memory_space<vmem>>, vector<8x1xf32>
      %cst_25 = arith.constant 1.562500e-02 : f32
      %28 = vector.broadcast %cst_25 : f32 to vector<8x1xf32>
      %29 = arith.mulf %27, %28 : vector<8x1xf32>
      %30 = arith.mulf %26, %26 : vector<8x1xf32>
      %31 = arith.subf %29, %30 : vector<8x1xf32>
      %cst_26 = arith.constant 0.000000e+00 : f32
      %32 = vector.broadcast %cst_26 : f32 to vector<8x1xf32>
      %33 = arith.maximumf %31, %32 : vector<8x1xf32>
      %c0_27 = arith.constant 0 : index
      %c0_28 = arith.constant 0 : index
      %34 = vector.load %arg3[%c0_27, %c0_28] : memref<8x1xf32, #tpu.memory_space<vmem>>, vector<8x1xf32>
      %cst_29 = arith.constant 9.99999974E-6 : f32
      %35 = vector.broadcast %cst_29 : f32 to vector<8x1xf32>
      %36 = arith.addf %33, %35 : vector<8x1xf32>
      %37 = math.rsqrt %36 : vector<8x1xf32>
      %38 = arith.mulf %34, %37 : vector<8x1xf32>
      %c0_30 = arith.constant 0 : index
      %c0_31 = arith.constant 0 : index
      %39 = vector.load %arg4[%c0_30, %c0_31] : memref<8x1xf32, #tpu.memory_space<vmem>>, vector<8x1xf32>
      %40 = arith.mulf %26, %38 : vector<8x1xf32>
      %41 = arith.subf %39, %40 : vector<8x1xf32>
      %c0_32 = arith.constant 0 : index
      %c0_33 = arith.constant 0 : index
      %c0_34 = arith.constant 0 : index
      %42 = vector.load %arg6[%c0_32, %c0_33, %c0_34] : memref<1x8x64xf32, #tpu.memory_space<vmem>>, vector<1x8x64xf32>
      %43 = vector.shape_cast %42 : vector<1x8x64xf32> to vector<8x64xf32>
      %44 = vector.broadcast %38 : vector<8x1xf32> to vector<8x64xf32>
      %45 = arith.mulf %43, %44 : vector<8x64xf32>
      %46 = vector.broadcast %41 : vector<8x1xf32> to vector<8x64xf32>
      %47 = arith.addf %45, %46 : vector<8x64xf32>
      %cst_35 = arith.constant 0.000000e+00 : f32
      %48 = vector.broadcast %cst_35 : f32 to vector<8x64xf32>
      %49 = arith.maximumf %47, %48 : vector<8x64xf32>
      %c0_36 = arith.constant 0 : index
      %c0_37 = arith.constant 0 : index
      %c0_38 = arith.constant 0 : index
      %50 = vector.load %arg6[%c0_36, %c0_37, %c0_38] : memref<1x8x64xf32, #tpu.memory_space<vmem>>, vector<1x8x64xf32>
      %51 = vector.shape_cast %50 : vector<1x8x64xf32> to vector<8x64xf32>
      %52 = vector.shape_cast %49 : vector<8x64xf32> to vector<1x8x64xf32>
      tpu.vector_store %arg6[%c0_36, %c0_37, %c0_38], %52 {strides = array<i32>} : memref<1x8x64xf32, #tpu.memory_space<vmem>>, vector<1x8x64xf32>,
    } else {
    }
    return
  }
  func.func @transform_0(%arg0: i32, %arg1: i32) -> (i32, i32) {
    %c0_i32 = arith.constant 0 : i32
    %c0_i32_0 = arith.constant 0 : i32
    %c0_i32_1 = arith.constant 0 : i32
    return %c0_i32, %c0_i32_0 : i32, i32
  }
  func.func @transform_1(%arg0: i32, %arg1: i32) -> (i32, i32) {
    %c0_i32 = arith.constant 0 : i32
    %c0_i32_0 = arith.constant 0 : i32
    %c0_i32_1 = arith.constant 0 : i32
    return %c0_i32, %c0_i32_0 : i32, i32
  }
  func.func @transform_2(%arg0: i32, %arg1: i32) -> (i32, i32) {
    %c0_i32 = arith.constant 0 : i32
    %c0_i32_0 = arith.constant 0 : i32
    %c0_i32_1 = arith.constant 0 : i32
    return %c0_i32, %c0_i32_0 : i32, i32
  }
  func.func @transform_3(%arg0: i32, %arg1: i32) -> (i32, i32, i32) {
    %c0_i32 = arith.constant 0 : i32
    %c0_i32_0 = arith.constant 0 : i32
    return %arg0, %c0_i32, %arg1 : i32, i32, i32
  }
  func.func @transform_4(%arg0: i32, %arg1: i32) -> (i32, i32, i32) {
    %c0_i32 = arith.constant 0 : i32
    %c0_i32_0 = arith.constant 0 : i32
    %c0_i32_1 = arith.constant 0 : i32
    return %arg0, %c0_i32, %c0_i32_0 : i32, i32, i32
  }
}

</mosaic_0001>

<llo_original>
// kernel: tpu_custom_call.1
$region0: #{tpu_custom_call.1}
  #allocation0 [shape = 'u32[]', space=smem, size = 0x4, offset = 0x4, fixed_abs, tag = 'smem constant byte address 0x4 - core index']
  #allocation1 [shape = 'u32[144,128]{1,0:T(1,128)}', space=vmem, size = 0x12000, scoped, tag = 'internal scratch']
  #allocation2 [shape = 'f32[8,1]{1,0:T(8,128)}', space=vmem, size = 0x1000, scoped, tag = 'scratch operand']
  #allocation3 [shape = 'f32[8,1]{1,0:T(8,128)}', space=vmem, size = 0x1000, scoped, tag = 'scratch operand']
  %s0 = inlined_call_operand.vmem [shape: bf16[8,64], index: 0, kind: input, shape index: {}]
  %s1 = inlined_call_operand.vmem [shape: f32[8,1], index: 1, kind: input, shape index: {}]
  %s2 = inlined_call_operand.vmem [shape: f32[8,1], index: 2, kind: input, shape index: {}]
  %s3 = inlined_call_operand.hbm [shape: bf16[2,64,64], index: 3, kind: input, shape index: {}]
  %s4 = inlined_call_operand.hbm [shape: f32[2,8,64], index: 4, kind: output, shape index: {}]
  %s5 = sld [smem:[#allocation0]]
  $region61: #{tpu_custom_call.1} parent=0
    _
  %s7 = ssub.s32 1, %s5
  %s8 = scalar_select 0, %s7, %s5
  $region1: #{tpu_custom_call.1} parent=0
    #allocation4 [shape = 'u8[32768]{0}', space=vmem, size = 0x8000, scoped, tag = 'input window, operand 3']
    #allocation5 [shape = 's32[2]{0}', space=sflag, size = 0x8, scoped, tag = 'scoped memory for tpu_custom_call.1']
    #allocation6 [shape = 's32[2]{0}', space=sflag, size = 0x8, scoped, tag = 'scoped memory for tpu_custom_call.1']
    #allocation7 [shape = 'u8[8192]{0}', space=vmem, size = 0x2000, scoped, tag = 'output window, operand 0']
    %9 = vsyncpa [#allocation5], 0
    %s10 = scalar_lea.sflag [#allocation5], 1
    %11 = vsyncpa %s10, 0
    %12 = vsyncpa [#allocation6], 0
    %s13 = scalar_lea.sflag [#allocation6], 1
    %14 = vsyncpa %s13, 0
    loop: start=0, step=1, limit=4
    $region2: #{tpu_custom_call.1} parent=1 // loop_pre_header
      _
    $region3: #{tpu_custom_call.1} parent=1 // loop_header
      %s16 = sphi 0, %s20
      %p17 = scmp.ge.s32.totalorder %s16, 4
      %s23 = sphi 0, %s35
      %s24 = sphi 0, %s31
      %s25 = sphi 0, %s23
      %s26 = sphi 0, %s24
      %s27 = sphi 0, %s25
      %s28 = sphi 0, %s26
      %s36 = sphi 0, %s36
      %s38 = sphi 0, %s36
      %s39 = sphi 0, %s38
      %s53 = sphi 0, %s39
      %s57 = sphi 0, %s57
      %s59 = sphi 0, %s57
      %s60 = sphi 0, %s59
      %s74 = sphi 0, %s60
      %s78 = sphi 0, %s78
      %s80 = sphi 0, %s78
      %s81 = sphi 0, %s80
      %s95 = sphi 0, %s81
      %s103 = sphi 0, %s105
      %s106 = sphi 0, %s103
      %s107 = sphi 0, %s106
      %s123 = sphi 0, %s107
      %s129 = sphi 0, %s131
      %s132 = sphi 0, %s129
      %s133 = sphi 0, %s132
      %s149 = sphi 0, %s133
    $region4: #{tpu_custom_call.1} parent=1 // loop_header_branch
      %19 = sbr.rel (%p17) target = $region8
    $region5: #{tpu_custom_call.1} parent=1 // loop_body
      %s21 = ssub.s32 %s16, 1
      %s22 = ssub.s32 %s16, 2
      %s29 = sadd.s32 1, %s24
      %p30 = scmp.ge.s32.totalorder %s29, 1
      %s31 = scalar_select %p30, 0, %s29
      %s32 = sadd.s32 1, %s23
      %s33 = scalar_select %p30, %s32, %s23
      %p34 = scmp.ge.s32.totalorder %s33, 2
      %s35 = scalar_select %p34, 0, %s33
      %s37 = sadd.s32 %s36, 1
      %p40 = scmp.eq.s32.totalorder %s16, 1
      %p41 = scmp.ne.s32.totalorder %s36, %s38
      %p42 = scmp.eq.s32.totalorder %s16, 0
      %p43 = por %p41, %p42
      %p44 = scmp.ne.s32.totalorder %s36, %s38
      %p45 = scmp.eq.s32.totalorder %s21, 1
      %p46 = por %p44, %p45
      %p47 = scmp.ne.s32.totalorder %s38, %s39
      %p48 = scmp.eq.s32.totalorder %s21, 0
      %p49 = por %p47, %p48
      %p50 = scmp.ne.s32.totalorder %s38, %s39
      %p51 = scmp.eq.s32.totalorder %s22, 1
      %p52 = por %p50, %p51
      %p54 = scmp.ne.s32.totalorder %s39, %s53
      %p55 = scmp.eq.s32.totalorder %s22, 0
      %p56 = por %p54, %p55
      %s58 = sadd.s32 %s57, 1
      %p61 = scmp.eq.s32.totalorder %s16, 1
      %p62 = scmp.ne.s32.totalorder %s57, %s59
      %p63 = scmp.eq.s32.totalorder %s16, 0
      %p64 = por %p62, %p63
      %p65 = scmp.ne.s32.totalorder %s57, %s59
      %p66 = scmp.eq.s32.totalorder %s21, 1
      %p67 = por %p65, %p66
      %p68 = scmp.ne.s32.totalorder %s59, %s60
      %p69 = scmp.eq.s32.totalorder %s21, 0
      %p70 = por %p68, %p69
      %p71 = scmp.ne.s32.totalorder %s59, %s60
      %p72 = scmp.eq.s32.totalorder %s22, 1
      %p73 = por %p71, %p72
      %p75 = scmp.ne.s32.totalorder %s60, %s74
      %p76 = scmp.eq.s32.totalorder %s22, 0
      %p77 = por %p75, %p76
      %s79 = sadd.s32 %s78, 1
      %p82 = scmp.eq.s32.totalorder %s16, 1
      %p83 = scmp.ne.s32.totalorder %s78, %s80
      %p84 = scmp.eq.s32.totalorder %s16, 0
      %p85 = por %p83, %p84
      %p86 = scmp.ne.s32.totalorder %s78, %s80
      %p87 = scmp.eq.s32.totalorder %s21, 1
      %p88 = por %p86, %p87
      %p89 = scmp.ne.s32.totalorder %s80, %s81
      %p90 = scmp.eq.s32.totalorder %s21, 0
      %p91 = por %p89, %p90
      %p92 = scmp.ne.s32.totalorder %s80, %s81
      %p93 = scmp.eq.s32.totalorder %s22, 1
      %p94 = por %p92, %p93
      %p96 = scmp.ne.s32.totalorder %s81, %s95
      %p97 = scmp.eq.s32.totalorder %s22, 0
      %p98 = por %p96, %p97
      %s99 = ssub.s32 %s23, %s35
      %s100 = ssub.s32 %s24, %s31
      %s101 = sor.u32 %s99, %s100
      %p102 = scmp.eq.s32.totalorder %s101, 0
      %s104 = sadd.s32 %s103, 1
      %s105 = scalar_select %p102, %s103, %s104
      %p108 = pneg %p102
      %p109 = scmp.eq.s32.totalorder %s16, 1
      %p110 = por %p108, %p109
      %p111 = scmp.ne.s32.totalorder %s103, %s106
      %p112 = scmp.eq.s32.totalorder %s16, 0
      %p113 = por %p111, %p112
      %p114 = scmp.ne.s32.totalorder %s103, %s106
      %p115 = scmp.eq.s32.totalorder %s21, 1
      %p116 = por %p114, %p115
      %p117 = scmp.ne.s32.totalorder %s106, %s107
      %p118 = scmp.eq.s32.totalorder %s21, 0
      %p119 = por %p117, %p118
      %p120 = scmp.ne.s32.totalorder %s106, %s107
      %p121 = scmp.eq.s32.totalorder %s22, 1
      %p122 = por %p120, %p121
      %p124 = scmp.ne.s32.totalorder %s107, %s123
      %p125 = scmp.eq.s32.totalorder %s22, 0
      %p126 = por %p124, %p125
      %s127 = ssub.s32 %s23, %s35
      %p128 = scmp.eq.s32.totalorder %s127, 0
      %s130 = sadd.s32 %s129, 1
      %s131 = scalar_select %p128, %s129, %s130
      %p134 = pneg %p128
      %p135 = scmp.eq.s32.totalorder %s16, 1
      %p136 = por %p134, %p135
      %p137 = scmp.ne.s32.totalorder %s129, %s132
      %p138 = scmp.eq.s32.totalorder %s16, 0
      %p139 = por %p137, %p138
      %p140 = scmp.ne.s32.totalorder %s129, %s132
      %p141 = scmp.eq.s32.totalorder %s21, 1
      %p142 = por %p140, %p141
      %p143 = scmp.ne.s32.totalorder %s132, %s133
      %p144 = scmp.eq.s32.totalorder %s21, 0
      %p145 = por %p143, %p144
      %p146 = scmp.ne.s32.totalorder %s132, %s133
      %p147 = scmp.eq.s32.totalorder %s22, 1
      %p148 = por %p146, %p147
      %p150 = scmp.ne.s32.totalorder %s133, %s149
      %p151 = scmp.eq.s32.totalorder %s22, 0
      %p152 = por %p150, %p151
      %p153 = scmp.le.s32.totalorder 1, %s16
      %p154 = scmp.lt.s32.totalorder %s16, 3
      %p155 = pnand %p153, %p154
      %p156 = pneg %p155
      // Predicated region
      $region9: #{tpu_custom_call.1} parent=5 // pred_check
        _
      $region10: #{tpu_custom_call.1} parent=5 // pred_check_branch
        %158 = sbr.rel (%p155) target = $region12
      $region11: #{tpu_custom_call.1} parent=5 // pred_region
        %s159 = ssub.s32 %s16, 1
        // Predicated region
        $region13: #{tpu_custom_call.1} parent=11 // pred_check
          %p160 = pneg %p49
        $region14: #{tpu_custom_call.1} parent=11 // pred_check_branch
          %162 = sbr.rel (%p160) target = $region16
        $region15: #{tpu_custom_call.1} parent=11 // pred_region
          _
        $region16: #{tpu_custom_call.1} parent=11 // pred_fallthru
          _
        // Predicated region
        $region17: #{tpu_custom_call.1} parent=11 // pred_check
          %p163 = pneg %p70
        $region18: #{tpu_custom_call.1} parent=11 // pred_check_branch
          %165 = sbr.rel (%p163) target = $region20
        $region19: #{tpu_custom_call.1} parent=11 // pred_region
          _
        $region20: #{tpu_custom_call.1} parent=11 // pred_fallthru
          _
        // Predicated region
        $region21: #{tpu_custom_call.1} parent=11 // pred_check
          %p166 = pneg %p91
        $region22: #{tpu_custom_call.1} parent=11 // pred_check_branch
          %168 = sbr.rel (%p166) target = $region24
        $region23: #{tpu_custom_call.1} parent=11 // pred_region
          _
        $region24: #{tpu_custom_call.1} parent=11 // pred_fallthru
          _
      $region12: #{tpu_custom_call.1} parent=5 // pred_fallthru
        _
      %p169 = scmp.lt.s32.totalorder %s16, 2
      // Predicated region
      $region25: #{tpu_custom_call.1} parent=5 // pred_check
        %p170 = pneg %p169
      $region26: #{tpu_custom_call.1} parent=5 // pred_check_branch
        %172 = sbr.rel (%p170) target = $region28
      $region27: #{tpu_custom_call.1} parent=5 // pred_region
        // Predicated region
        $region29: #{tpu_custom_call.1} parent=27 // pred_check
          %p173 = pneg %p113
        $region30: #{tpu_custom_call.1} parent=27 // pred_check_branch
          %175 = sbr.rel (%p173) target = $region32
        $region31: #{tpu_custom_call.1} parent=27 // pred_region
          %s176 = sand.u32 %s103, 1
          %s177 = scalar_lea.sflag [#allocation5], %s176
          %s178 = sand.u32 %s103, 1
          %s179 = smul.addr %s178, 32
          %s180 = scalar_lea.vmem [#allocation4], %s179
          %s182 = ssub.s32 512, 512
          %183 = vsyncadd %s177, %s182
          %s184 = smul.addr %s23, 8
          %s185 = sadd.s32 %s24, %s184
          %s186 = smul.addr %s185, 64
          %s187 = scalar_lea.hbm %s3, %s186
          %s188 = sshll.u32 %s180, 4
          %s189 = int_to_ptr.vmem [resolvable:$true] %s188
          %194 = dma.hbm_to_vmem [thread:$0]  %s187, 512, %s189, %s177, 64, 64, 4
        $region32: #{tpu_custom_call.1} parent=27 // pred_fallthru
          _
      $region28: #{tpu_custom_call.1} parent=5 // pred_fallthru
        _
      %p195 = scmp.le.s32.totalorder 1, %s16
      %p196 = scmp.lt.s32.totalorder %s16, 3
      %p197 = pnand %p195, %p196
      %p198 = pneg %p197
      // Predicated region
      $region33: #{tpu_custom_call.1} parent=5 // pred_check
        _
      $region34: #{tpu_custom_call.1} parent=5 // pred_check_branch
        %200 = sbr.rel (%p197) target = $region36
      $region35: #{tpu_custom_call.1} parent=5 // pred_region
        %s201 = ssub.s32 %s16, 1
        %s202 = sand.u32 %s106, 1
        %s203 = scalar_lea.sflag [#allocation5], %s202
        %s204 = sand.u32 %s106, 1
        %s205 = smul.addr %s204, 32
        %s206 = scalar_lea.vmem [#allocation4], %s205
        // Predicated region
        $region37: #{tpu_custom_call.1} parent=35 // pred_check
          %p207 = pneg %p119
        $region38: #{tpu_custom_call.1} parent=35 // pred_check_branch
          %209 = sbr.rel (%p207) target = $region40
        $region39: #{tpu_custom_call.1} parent=35 // pred_region
          %210 = dma.done %s203, 512
        $region40: #{tpu_custom_call.1} parent=35 // pred_fallthru
          _
        %p211 = pneg %p49
        %p212 = pneg %p46
        %p213 = pneg %p70
        %p214 = pneg %p67
        %p215 = pneg %p91
        %p216 = pneg %p88
        %s217 = sand.u32 %s106, 1
        %s218 = scalar_lea.sflag [#allocation5], %s217
        %s219 = sand.u32 %s106, 1
        %s220 = smul.addr %s219, 32
        %s221 = scalar_lea.vmem [#allocation4], %s220
        %p222 = pneg %p119
        %p223 = pneg %p116
        %p224 = pneg %p145
        %p225 = pneg %p142
        %s226 = sand.u32 %s132, 1
        %s227 = scalar_lea.sflag [#allocation6], %s226
        %s228 = sand.u32 %s132, 1
        %s229 = smul.addr %s228, 8
        %s230 = scalar_lea.vmem [#allocation7], %s229
        %p232 = scmp.eq.s32.totalorder %s26, 0
        // Predicated region
        $region41: #{tpu_custom_call.1} parent=35 // pred_check
          %p233 = pneg %p232
        $region42: #{tpu_custom_call.1} parent=35 // pred_check_branch
          %235 = sbr.rel (%p233) target = $region44
        $region43: #{tpu_custom_call.1} parent=35 // pred_region
          %vm236 = vcmask 7168
          %237 = vst.msk [vmem:[#allocation2] sm:$0xff] %vm236, 0.0
          %238 = vst.msk [vmem:[#allocation3] sm:$0xff] %vm236, 0.0
        $region44: #{tpu_custom_call.1} parent=35 // pred_fallthru
          _
        %v239 = vld [vmem:[%s0] sm:$0xf]
        %v240 = vld [vmem:[%s206] sm:$0xf]
        %v241 = vld [vmem:[%s206 + $0x4] sm:$0xf]
        %v242 = vld [vmem:[%s206 + $0x8] sm:$0xf]
        %v243 = vld [vmem:[%s206 + $0xc] sm:$0xf]
        %v244 = vld [vmem:[%s206 + $0x10] sm:$0xf]
        %v245 = vld [vmem:[%s206 + $0x14] sm:$0xf]
        %v246 = vld [vmem:[%s206 + $0x18] sm:$0xf]
        %v247 = vld [vmem:[%s206 + $0x1c] sm:$0xf]
        %v256 = vunpack.c.l.b16 %v240
        %v257 = vunpack.c.l.b16 %v241
        %v258 = vunpack.c.l.b16 %v242
        %v259 = vunpack.c.l.b16 %v243
        %v260 = vunpack.c.l.b16 %v244
        %v261 = vunpack.c.l.b16 %v245
        %v262 = vunpack.c.l.b16 %v246
        %v263 = vunpack.c.l.b16 %v247
        %v264 = vpack.c.b16 %v257, %v256
        %v265 = vpack.c.b16 %v259, %v258
        %v266 = vpack.c.b16 %v261, %v260
        %v267 = vpack.c.b16 %v263, %v262
        %vm272 = vcmask 523264
        %v274 = vsel %vm272, %v239, 0
        %276 = vmatprep.subr.bf16.mxu0 0
        %277 = vmatpush1.bf16.msra.mxu0 0
        %278 = vmatprep.subr.bf16.mxu0 0
        %279 = vmatpush1.bf16.msra.mxu0 0
        %280 = vmatprep.subr.bf16.mxu0 0
        %281 = vmatpush1.bf16.msra.mxu0 0
        %282 = vmatprep.subr.bf16.mxu0 0
        %283 = vmatpush1.bf16.msra.mxu0 0
        %284 = vmatprep.subr.bf16.mxu0 0
        %285 = vmatpush1.bf16.msra.mxu0 %v267
        %286 = vmatprep.subr.bf16.mxu0 0
        %287 = vmatpush1.bf16.msra.mxu0 %v266
        %288 = vmatprep.subr.bf16.mxu0 0
        %289 = vmatpush1.bf16.msra.mxu0 %v265
        %290 = vmatprep.subr.bf16.mxu0 0
        %291 = vmatpush1.bf16.msra.mxu0 %v264
        %292 = vmatprep.subr.bf16.mxu0 0
        %293 = vmatpush2.bf16.msra.mxu0 0
        %294 = vmatprep.subr.bf16.mxu0 0
        %295 = vmatpush2.bf16.msra.mxu0 0
        %296 = vmatprep.subr.bf16.mxu0 0
        %297 = vmatpush2.bf16.msra.mxu0 0
        %298 = vmatprep.subr.bf16.mxu0 0
        %299 = vmatpush2.bf16.msra.mxu0 0
        %300 = vmatprep.subr.bf16.mxu0 0
        %301 = vmatpush2.bf16.msra.mxu0 0
        %302 = vmatprep.subr.bf16.mxu0 0
        %303 = vmatpush2.bf16.msra.mxu0 0
        %304 = vmatprep.subr.bf16.mxu0 0
        %305 = vmatpush2.bf16.msra.mxu0 0
        %306 = vmatprep.subr.bf16.mxu0 0
        %307 = vmatpush2.bf16.msra.mxu0 0
        %308 = vmatprep.mubr.bf16.mxu0 0
        %309 = vmatmul.mubr.bf16.gmra.mxu0 %v274
        %v310 = vpop.f32.mrf.mxu0
        %v311 = vadd.f32 0.0, %v310
        %v312 = vpop.f32.mrf.mxu0
        %v313 = vpop.f32.mrf.mxu0
        %v314 = vpop.f32.mrf.mxu0
        %315 = vdwg.mxu0
        %v316 = vld [vmem:[#allocation2] sm:$0xff]
        %v317 = vsel %vm272, %v311, 0.0
        %318 = vadd.xlane.f32.xlu0 %v317
        %v319 = vpop.xlane.xlu0 %318
        %v320 = vadd.f32 %v316, %v319
        %vm321 = vcmask 7168
        %322 = vst.msk [vmem:[#allocation2] sm:$0xff] %vm321, %v320
        %v323 = vld [vmem:[#allocation3] sm:$0xff]
        %v324 = vmul.f32 %v311, %v311
        %v325 = vsel %vm272, %v324, 0.0
        %326 = vadd.xlane.f32.xlu0 %v325
        %v327 = vpop.xlane.xlu0 %326
        %v328 = vadd.f32 %v323, %v327
        %329 = vst.msk [vmem:[#allocation3] sm:$0xff] %vm321, %v328
        %330 = vst.msk [vmem:[%s230] sm:$0xff] %vm272, %v311
        // Predicated region
        $region45: #{tpu_custom_call.1} parent=35 // pred_check
          %p331 = pneg %p232
        $region46: #{tpu_custom_call.1} parent=35 // pred_check_branch
          %333 = sbr.rel (%p331) target = $region48
        $region47: #{tpu_custom_call.1} parent=35 // pred_region
          %v334 = vld [vmem:[#allocation2] sm:$0xff]
          %v335 = vmul.f32 %v334, 0.015625
          %v336 = vld [vmem:[#allocation3] sm:$0xff]
          %v337 = vmul.f32 %v336, 0.015625
          %v338 = vmul.f32 %v335, %v335
          %v339 = vsub.f32 %v337, %v338
          %v340 = vmax.f32 %v339, 0.0
          %v341 = vld [vmem:[%s1] sm:$0xff]
          %v342 = vadd.f32 %v340, 1e-05
          %v343 = vrsqrt.pop %v342
          %v344 = vmul.f32 %v341, %v343
          %v345 = vld [vmem:[%s2] sm:$0xff]
          %v346 = vmul.f32 %v335, %v344
          %v347 = vsub.f32 %v345, %v346
          %v348 = vld [vmem:[%s230] sm:$0xff]
          %350 = vset.pattern.permute.xlu0 0
          %351 = vperm.xlu0 %350, %v344
          %v352 = vpop.permute.xlu0 %351
          %v354 = vmul.f32 %v348, %v352
          %356 = vset.pattern.permute.xlu0 0
          %357 = vperm.xlu0 %356, %v347
          %v358 = vpop.permute.xlu0 %357
          %v360 = vadd.f32 %v354, %v358
          %v361 = vmax.f32 %v360, 0.0
          %362 = vst.msk [vmem:[%s230] sm:$0xff] %vm272, %v361
        $region48: #{tpu_custom_call.1} parent=35 // pred_fallthru
          _
        %s363 = sand.u32 %s132, 1
        %s364 = scalar_lea.sflag [#allocation6], %s363
        %s365 = sand.u32 %s132, 1
        %s366 = smul.addr %s365, 8
        %s367 = scalar_lea.vmem [#allocation7], %s366
        // Predicated region
        $region49: #{tpu_custom_call.1} parent=35 // pred_check
          %p368 = pneg %p142
        $region50: #{tpu_custom_call.1} parent=35 // pred_check_branch
          %370 = sbr.rel (%p368) target = $region52
        $region51: #{tpu_custom_call.1} parent=35 // pred_region
          %s372 = ssub.s32 128, 128
          %373 = vsyncadd %s364, %s372
          %s374 = smul.addr %s25, 128
          %s375 = scalar_lea.hbm %s4, %s374
          %s377 = sshll.u32 %s367, 4
          %s378 = int_to_ptr.vmem [resolvable:$true] %s377
          %380 = dma.vmem_to_hbm [thread:$0]  %s378, 128, %s375, %s364
        $region52: #{tpu_custom_call.1} parent=35 // pred_fallthru
          _
      $region36: #{tpu_custom_call.1} parent=5 // pred_fallthru
        _
      %p381 = scmp.le.s32.totalorder 2, %s16
      // Predicated region
      $region53: #{tpu_custom_call.1} parent=5 // pred_check
        %p382 = pneg %p381
      $region54: #{tpu_custom_call.1} parent=5 // pred_check_branch
        %384 = sbr.rel (%p382) target = $region56
      $region55: #{tpu_custom_call.1} parent=5 // pred_region
        %s385 = ssub.s32 %s16, 2
        // Predicated region
        $region57: #{tpu_custom_call.1} parent=55 // pred_check
          %p386 = pneg %p148
        $region58: #{tpu_custom_call.1} parent=55 // pred_check_branch
          %388 = sbr.rel (%p386) target = $region60
        $region59: #{tpu_custom_call.1} parent=55 // pred_region
          %s389 = sand.u32 %s133, 1
          %s390 = scalar_lea.sflag [#allocation6], %s389
          %s391 = sand.u32 %s133, 1
          %s392 = smul.addr %s391, 8
          %s393 = scalar_lea.vmem [#allocation7], %s392
          %394 = dma.done %s390, 128
        $region60: #{tpu_custom_call.1} parent=55 // pred_fallthru
          _
      $region56: #{tpu_custom_call.1} parent=5 // pred_fallthru
        _
    $region6: #{tpu_custom_call.1} parent=1 // loop_footer
      %s20 = sadd.s32 1, %s16
    $region7: #{tpu_custom_call.1} parent=1 // loop_footer_branch
      %15 = sbr.rel target = $region3
    $region8: #{tpu_custom_call.1} parent=1 // loop_exit
      _
    %395 = vsyncpa [#allocation5], 1
    %s396 = scalar_lea.sflag [#allocation5], 1
    %397 = vsyncpa %s396, 1
    %398 = vsyncpa [#allocation6], 1
    %s399 = scalar_lea.sflag [#allocation6], 1
    %400 = vsyncpa %s399, 1

</llo_original>
